<compile_context>
chip_gen: v7x
topology: tpu7x:2x2x1
jax: 0.10.0
libtpu: 0.0.40
codegen_flags: <defaults>
</compile_context>

<pallas_src>
import functools

import jax
import jax.numpy as jnp
from jax.experimental import pallas as pl
from jax.experimental.pallas import tpu as pltpu


# Logical layer sizes of the module and their lane-aligned (padded) versions.
_DIMS = [(28 * 28, 50), (50, 250), (250, 50), (50, 10)]
_PAD = {28 * 28: 28 * 28, 50: 128, 250: 256, 10: 128}


def _round_up(n, m):
    return ((n + m - 1) // m) * m


def _mlp_kernel(x_ref,
                w1_ref, b1_ref,
                w2_ref, b2_ref,
                w3_ref, b3_ref,
                w4_ref, b4_ref,
                o_ref):
    """Fused padded MLP: (TB,784) f32 -> 128 -> 256 -> 128 -> 128 bf16."""
    # In-kernel downcast: f32 tile streamed by the BlockSpec DMA, cast on the
    # VPU (VALU slack) just before the first MXU matmul.
    h = x_ref[...].astype(jnp.bfloat16)              # bf16 (TB, 784)

    h = jnp.dot(h, w1_ref[...], preferred_element_type=jnp.float32) + b1_ref[...]
    h = jnp.maximum(h, 0.0).astype(jnp.bfloat16)     # ReLU (Dropout = identity, eval)

    h = jnp.dot(h, w2_ref[...], preferred_element_type=jnp.float32) + b2_ref[...]
    h = jnp.maximum(h, 0.0).astype(jnp.bfloat16)

    h = jnp.dot(h, w3_ref[...], preferred_element_type=jnp.float32) + b3_ref[...]
    h = jnp.maximum(h, 0.0).astype(jnp.bfloat16)

    out = jnp.dot(h, w4_ref[...], preferred_element_type=jnp.float32) + b4_ref[...]
    o_ref[...] = out.astype(o_ref.dtype)             # bf16 (TB, 128); cols 10: are 0


def _pad_params(params):
    """Zero-pad (in,out) weights / (1,out) biases to lane-aligned shapes.

    Weights -> bf16, biases -> f32.  Padding is exact: padded activation
    columns are zero and meet zero rows of the next layer's weight.
    NOTE: weights are stored (in_features, out_features) — transposed vs
    torch.nn.Linear's (out, in); a checkpoint loader must transpose.
    """
    padded = []
    for (fan_in, fan_out), (w, b) in zip(_DIMS, params):
        assert w.shape == (fan_in, fan_out), (w.shape, (fan_in, fan_out))
        assert b.shape == (1, fan_out), (b.shape, (1, fan_out))
        ip, op = _PAD[fan_in], _PAD[fan_out]
        wp = jnp.zeros((ip, op), jnp.bfloat16).at[:fan_in, :fan_out].set(
            w.astype(jnp.bfloat16))
        bp = jnp.zeros((1, op), jnp.float32).at[:, :fan_out].set(
            b.astype(jnp.float32))
        padded.append((wp, bp))
    return padded


@functools.partial(jax.jit, static_argnames=("tb_max",))
def mnist_mlp_forward(x, params, *, tb_max=2048):
    """x: (B, 1, 28, 28) or (B, 784) float32. params: 4x (w=(in,out), b=(1,out)).

    Returns (B, 10) float32 logits.
    """
    x2d = x.reshape(-1, 28 * 28)                     # free reshape (metadata only)
    B = x2d.shape[0]

    # Minimal sublane alignment: pad the batch to a multiple of 8 (and >= 8).
    # Typical batch sizes are already multiples of 8 so this is usually a
    # no-op; ragged last tiles w.r.t. TB are handled by the cdiv grid with no
    # full-array pad copy.
    B8 = _round_up(max(B, 8), 8)
    if B8 != B:
        x2d = jnp.pad(x2d, ((0, B8 - B), (0, 0)))

    # Batch tile: large enough to amortize per-grid-step overhead, capped for
    # v7x VMEM (f32 x tile x2 buffers at TB=2048 ~ 12.5 MiB), and split so the
    # grid has >= 2 steps whenever possible (megacore on v7x).
    TB = min(int(tb_max), B8)
    if B8 >= 16:
        TB = min(TB, _round_up(-(-B8 // 2), 8))
    n_blocks = pl.cdiv(B8, TB)
    Bp = n_blocks * TB                               # output rows: all writes in-bounds

    (w1, b1), (w2, b2), (w3, b3), (w4, b4) = _pad_params(params)
    n_out = w4.shape[1]                              # 128 (lane-dense output)

    # Weights / biases: same block every grid step -> VMEM-resident.
    const = lambda a: pl.BlockSpec(a.shape, lambda i: (0, 0))

    out = pl.pallas_call(
        _mlp_kernel,
        out_shape=jax.ShapeDtypeStruct((Bp, n_out), jnp.bfloat16),
        grid_spec=pltpu.PrefetchScalarGridSpec(
            num_scalar_prefetch=0,
            grid=(n_blocks,),
            in_specs=[
                pl.BlockSpec((TB, 28 * 28), lambda i: (i, 0)),   # streamed f32 x tile
                const(w1), const(b1),
                const(w2), const(b2),
                const(w3), const(b3),
                const(w4), const(b4),
            ],
            out_specs=pl.BlockSpec((TB, n_out), lambda i: (i, 0)),
        ),
        compiler_params=pltpu.CompilerParams(
            dimension_semantics=("parallel",),       # megacore split on v7x
            vmem_limit_bytes=48 << 20,               # headroom; < v7x 64 MiB physical
        ),
    )(x2d, w1, b1, w2, b2, w3, b3, w4, b4)

    return out[:B, :10].astype(jnp.float32)


def init_params(key):
    """Deterministic init matching nn.Linear shapes (uniform +-1/sqrt(fan_in)).

    Weights stored as (in_features, out_features); biases as (1, out_features).
    """
    params = []
    for (fan_in, fan_out) in _DIMS:
        key, kw, kb = jax.random.split(key, 3)
        bound = 1.0 / jnp.sqrt(jnp.float32(fan_in))
        w = jax.random.uniform(kw, (fan_in, fan_out), jnp.float32, -bound, bound)
        b = jax.random.uniform(kb, (1, fan_out), jnp.float32, -bound, bound)
        params.append((w, b))
    return params


def _reference_forward_f32(x, params):
    """Pure-JAX f32 reference (module semantics, eval mode)."""
    h = x.reshape(-1, 28 * 28).astype(jnp.float32)
    (w1, b1), (w2, b2), (w3, b3), (w4, b4) = params
    h = jnp.maximum(h @ w1 + b1, 0.0)
    h = jnp.maximum(h @ w2 + b2, 0.0)
    h = jnp.maximum(h @ w3 + b3, 0.0)
    return h @ w4 + b4


def _reference_forward_bf16(x, params):
    """Mirrors the kernel's bf16 / f32-accumulate arithmetic (f32 result,
    i.e. before the kernel's final bf16 output store)."""
    h = x.reshape(-1, 28 * 28).astype(jnp.bfloat16)
    for i, (w, b) in enumerate(params):
        y = jnp.dot(h, w.astype(jnp.bfloat16),
                    preferred_element_type=jnp.float32) + b.astype(jnp.float32)
        if i < len(params) - 1:
            h = jnp.maximum(y, 0.0).astype(jnp.bfloat16)
        else:
            return y


if __name__ == "__main__":
    key = jax.random.PRNGKey(0)
    key, kx = jax.random.split(key)

    # Small MNIST-shaped batch: NCHW (2, 1, 28, 28), like the PyTorch module.
    x = jax.random.normal(kx, (2, 1, 28, 28), jnp.float32)
    params = init_params(key)

    out = jax.block_until_ready(mnist_mlp_forward(x, params))
    assert out.shape == (2, 10), out.shape

    # Tight-ish check vs a reference mirroring the kernel's bf16/f32 arithmetic
    # (1e-2 tolerance absorbs the final bf16 output store), loose check vs the
    # full-f32 module semantics.
    ref_bf16 = _reference_forward_bf16(x, params)
    ref_f32 = _reference_forward_f32(x, params)
    assert jnp.allclose(out, ref_bf16, atol=1e-2, rtol=1e-2), "mismatch vs bf16-mirrored reference"
    assert jnp.allclose(out, ref_f32, atol=5e-2, rtol=5e-2), "mismatch vs f32 reference"

    print("KERNEL_OK")
</pallas_src>

<mosaic_0001>
module attributes {stable_mosaic.version = 11 : i64} {
  func.func @_mlp_kernel(%arg0: i32, %arg1: memref<8x784xf32, #tpu.memory_space<vmem>>, %arg2: memref<784x128xbf16, #tpu.memory_space<vmem>>, %arg3: memref<1x128xf32, #tpu.memory_space<vmem>>, %arg4: memref<128x256xbf16, #tpu.memory_space<vmem>>, %arg5: memref<1x256xf32, #tpu.memory_space<vmem>>, %arg6: memref<256x128xbf16, #tpu.memory_space<vmem>>, %arg7: memref<1x128xf32, #tpu.memory_space<vmem>>, %arg8: memref<128x128xbf16, #tpu.memory_space<vmem>>, %arg9: memref<1x128xf32, #tpu.memory_space<vmem>>, %arg10: memref<8x128xbf16, #tpu.memory_space<vmem>>) attributes {dimension_semantics = [#tpu.dimension_semantics<parallel>], iteration_bounds = array<i64: 1>, scalar_prefetch = 0 : i64, scratch_operands = 0 : i64, tpu.core_type = #tpu.core_type<tc>, window_params = [{transform_indices = @transform_0, window_bounds = array<i64: 8, 784>}, {pipeline_mode = #tpu.pipeline_mode<synchronous>, transform_indices = @transform_1, window_bounds = array<i64: 784, 128>}, {pipeline_mode = #tpu.pipeline_mode<synchronous>, transform_indices = @transform_2, window_bounds = array<i64: 1, 128>}, {pipeline_mode = #tpu.pipeline_mode<synchronous>, transform_indices = @transform_3, window_bounds = array<i64: 128, 256>}, {pipeline_mode = #tpu.pipeline_mode<synchronous>, transform_indices = @transform_4, window_bounds = array<i64: 1, 256>}, {pipeline_mode = #tpu.pipeline_mode<synchronous>, transform_indices = @transform_5, window_bounds = array<i64: 256, 128>}, {pipeline_mode = #tpu.pipeline_mode<synchronous>, transform_indices = @transform_6, window_bounds = array<i64: 1, 128>}, {pipeline_mode = #tpu.pipeline_mode<synchronous>, transform_indices = @transform_7, window_bounds = array<i64: 128, 128>}, {pipeline_mode = #tpu.pipeline_mode<synchronous>, transform_indices = @transform_8, window_bounds = array<i64: 1, 128>}, {transform_indices = @transform_9, window_bounds = array<i64: 8, 128>}]} {
    %c0 = arith.constant 0 : index
    %c0_0 = arith.constant 0 : index
    %0 = vector.load %arg1[%c0, %c0_0] : memref<8x784xf32, #tpu.memory_space<vmem>>, vector<8x784xf32>
    %1 = arith.truncf %0 : vector<8x784xf32> to vector<8x784xbf16>
    %c0_1 = arith.constant 0 : index
    %c0_2 = arith.constant 0 : index
    %2 = vector.load %arg2[%c0_1, %c0_2] : memref<784x128xbf16, #tpu.memory_space<vmem>>, vector<784x128xbf16>
    %cst = arith.constant dense<0.000000e+00> : vector<8x128xf32>
    %3 = tpu.matmul %1, %2, %cst {dimension_numbers = #tpu.dot_dimension_numbers<[1], [0], [0], [1], [0, 0, 1, 1], [], []>} : vector<8x784xbf16>, vector<784x128xbf16>, vector<8x128xf32> -> vector<8x128xf32>
    %c0_3 = arith.constant 0 : index
    %c0_4 = arith.constant 0 : index
    %4 = vector.load %arg3[%c0_3, %c0_4] : memref<1x128xf32, #tpu.memory_space<vmem>>, vector<1x128xf32>
    %5 = vector.broadcast %4 : vector<1x128xf32> to vector<8x128xf32>
    %6 = arith.addf %3, %5 : vector<8x128xf32>
    %cst_5 = arith.constant 0.000000e+00 : f32
    %7 = vector.broadcast %cst_5 : f32 to vector<8x128xf32>
    %8 = arith.maximumf %6, %7 : vector<8x128xf32>
    %9 = arith.truncf %8 : vector<8x128xf32> to vector<8x128xbf16>
    %c0_6 = arith.constant 0 : index
    %c0_7 = arith.constant 0 : index
    %10 = vector.load %arg4[%c0_6, %c0_7] : memref<128x256xbf16, #tpu.memory_space<vmem>>, vector<128x256xbf16>
    %cst_8 = arith.constant dense<0.000000e+00> : vector<8x256xf32>
    %11 = tpu.matmul %9, %10, %cst_8 {dimension_numbers = #tpu.dot_dimension_numbers<[1], [0], [0], [1], [0, 0, 1, 1], [], []>} : vector<8x128xbf16>, vector<128x256xbf16>, vector<8x256xf32> -> vector<8x256xf32>
    %c0_9 = arith.constant 0 : index
    %c0_10 = arith.constant 0 : index
    %12 = vector.load %arg5[%c0_9, %c0_10] : memref<1x256xf32, #tpu.memory_space<vmem>>, vector<1x256xf32>
    %13 = vector.broadcast %12 : vector<1x256xf32> to vector<8x256xf32>
    %14 = arith.addf %11, %13 : vector<8x256xf32>
    %cst_11 = arith.constant 0.000000e+00 : f32
    %15 = vector.broadcast %cst_11 : f32 to vector<8x256xf32>
    %16 = arith.maximumf %14, %15 : vector<8x256xf32>
    %17 = arith.truncf %16 : vector<8x256xf32> to vector<8x256xbf16>
    %c0_12 = arith.constant 0 : index
    %c0_13 = arith.constant 0 : index
    %18 = vector.load %arg6[%c0_12, %c0_13] : memref<256x128xbf16, #tpu.memory_space<vmem>>, vector<256x128xbf16>
    %cst_14 = arith.constant dense<0.000000e+00> : vector<8x128xf32>
    %19 = tpu.matmul %17, %18, %cst_14 {dimension_numbers = #tpu.dot_dimension_numbers<[1], [0], [0], [1], [0, 0, 1, 1], [], []>} : vector<8x256xbf16>, vector<256x128xbf16>, vector<8x128xf32> -> vector<8x128xf32>
    %c0_15 = arith.constant 0 : index
    %c0_16 = arith.constant 0 : index
    %20 = vector.load %arg7[%c0_15, %c0_16] : memref<1x128xf32, #tpu.memory_space<vmem>>, vector<1x128xf32>
    %21 = vector.broadcast %20 : vector<1x128xf32> to vector<8x128xf32>
    %22 = arith.addf %19, %21 : vector<8x128xf32>
    %cst_17 = arith.constant 0.000000e+00 : f32
    %23 = vector.broadcast %cst_17 : f32 to vector<8x128xf32>
    %24 = arith.maximumf %22, %23 : vector<8x128xf32>
    %25 = arith.truncf %24 : vector<8x128xf32> to vector<8x128xbf16>
    %c0_18 = arith.constant 0 : index
    %c0_19 = arith.constant 0 : index
    %26 = vector.load %arg8[%c0_18, %c0_19] : memref<128x128xbf16, #tpu.memory_space<vmem>>, vector<128x128xbf16>
    %cst_20 = arith.constant dense<0.000000e+00> : vector<8x128xf32>
    %27 = tpu.matmul %25, %26, %cst_20 {dimension_numbers = #tpu.dot_dimension_numbers<[1], [0], [0], [1], [0, 0, 1, 1], [], []>} : vector<8x128xbf16>, vector<128x128xbf16>, vector<8x128xf32> -> vector<8x128xf32>
    %c0_21 = arith.constant 0 : index
    %c0_22 = arith.constant 0 : index
    %28 = vector.load %arg9[%c0_21, %c0_22] : memref<1x128xf32, #tpu.memory_space<vmem>>, vector<1x128xf32>
    %29 = vector.broadcast %28 : vector<1x128xf32> to vector<8x128xf32>
    %30 = arith.addf %27, %29 : vector<8x128xf32>
    %31 = arith.truncf %30 : vector<8x128xf32> to vector<8x128xbf16>
    %c0_23 = arith.constant 0 : index
    %c0_24 = arith.constant 0 : index
    %32 = vector.load %arg10[%c0_23, %c0_24] : memref<8x128xbf16, #tpu.memory_space<vmem>>, vector<8x128xbf16>
    tpu.vector_store %arg10[%c0_23, %c0_24], %31 {strides = array<i32>} : memref<8x128xbf16, #tpu.memory_space<vmem>>, vector<8x128xbf16>,
    return
  }
  func.func @transform_0(%arg0: i32) -> (i32, i32) {
    %c0_i32 = arith.constant 0 : i32
    %c0_i32_0 = arith.constant 0 : i32
    return %arg0, %c0_i32 : i32, i32
  }
  func.func @transform_1(%arg0: i32) -> (i32, i32) {
    %c0_i32 = arith.constant 0 : i32
    %c0_i32_0 = arith.constant 0 : i32
    %c0_i32_1 = arith.constant 0 : i32
    return %c0_i32, %c0_i32_0 : i32, i32
  }
  func.func @transform_2(%arg0: i32) -> (i32, i32) {
    %c0_i32 = arith.constant 0 : i32
    %c0_i32_0 = arith.constant 0 : i32
    %c0_i32_1 = arith.constant 0 : i32
    return %c0_i32, %c0_i32_0 : i32, i32
  }
  func.func @transform_3(%arg0: i32) -> (i32, i32) {
    %c0_i32 = arith.constant 0 : i32
    %c0_i32_0 = arith.constant 0 : i32
    %c0_i32_1 = arith.constant 0 : i32
    return %c0_i32, %c0_i32_0 : i32, i32
  }
  func.func @transform_4(%arg0: i32) -> (i32, i32) {
    %c0_i32 = arith.constant 0 : i32
    %c0_i32_0 = arith.constant 0 : i32
    %c0_i32_1 = arith.constant 0 : i32
    return %c0_i32, %c0_i32_0 : i32, i32
  }
  func.func @transform_5(%arg0: i32) -> (i32, i32) {
    %c0_i32 = arith.constant 0 : i32
    %c0_i32_0 = arith.constant 0 : i32
    %c0_i32_1 = arith.constant 0 : i32
    return %c0_i32, %c0_i32_0 : i32, i32
  }
  func.func @transform_6(%arg0: i32) -> (i32, i32) {
    %c0_i32 = arith.constant 0 : i32
    %c0_i32_0 = arith.constant 0 : i32
    %c0_i32_1 = arith.constant 0 : i32
    return %c0_i32, %c0_i32_0 : i32, i32
  }
  func.func @transform_7(%arg0: i32) -> (i32, i32) {
    %c0_i32 = arith.constant 0 : i32
    %c0_i32_0 = arith.constant 0 : i32
    %c0_i32_1 = arith.constant 0 : i32
    return %c0_i32, %c0_i32_0 : i32, i32
  }
  func.func @transform_8(%arg0: i32) -> (i32, i32) {
    %c0_i32 = arith.constant 0 : i32
    %c0_i32_0 = arith.constant 0 : i32
    %c0_i32_1 = arith.constant 0 : i32
    return %c0_i32, %c0_i32_0 : i32, i32
  }
  func.func @transform_9(%arg0: i32) -> (i32, i32) {
    %c0_i32 = arith.constant 0 : i32
    %c0_i32_0 = arith.constant 0 : i32
    return %arg0, %c0_i32 : i32, i32
  }
}

</mosaic_0001>

<llo_original>
// kernel: mnist_mlp_forward.1
$region0: #{mnist_mlp_forward.1}
  #allocation0 [shape = 'u32[]', space=smem, size = 0x4, offset = 0x4, fixed_abs, tag = 'smem constant byte address 0x4 - core index']
  #allocation1 [shape = 'u32[144,128]{1,0:T(1,128)}', space=vmem, size = 0x12000, scoped, tag = 'internal scratch']
  %s0 = inlined_call_operand.vmem [shape: f32[8,784], index: 0, kind: input, shape index: {}]
  %s1 = inlined_call_operand.vmem [shape: bf16[784,128], index: 1, kind: input, shape index: {}]
  %s2 = inlined_call_operand.vmem [shape: f32[1,128], index: 2, kind: input, shape index: {}]
  %s3 = inlined_call_operand.vmem [shape: bf16[128,256], index: 3, kind: input, shape index: {}]
  %s4 = inlined_call_operand.vmem [shape: f32[1,256], index: 4, kind: input, shape index: {}]
  %s5 = inlined_call_operand.vmem [shape: bf16[256,128], index: 5, kind: input, shape index: {}]
  %s6 = inlined_call_operand.vmem [shape: f32[1,128], index: 6, kind: input, shape index: {}]
  %s7 = inlined_call_operand.vmem [shape: bf16[128,128], index: 7, kind: input, shape index: {}]
  %s8 = inlined_call_operand.vmem [shape: f32[1,128], index: 8, kind: input, shape index: {}]
  %s9 = inlined_call_operand.vmem [shape: bf16[8,128], index: 9, kind: output, shape index: {}]
  %s10 = sld [smem:[#allocation0]]
  $region46: #{mnist_mlp_forward.1} parent=0
    _
  %s12 = ssub.s32 1, %s10
  %s13 = scalar_select 0, %s12, %s10
  // Predicated region
  $region2: #{mnist_mlp_forward.1} parent=0 // pred_check
    _
  $region3: #{mnist_mlp_forward.1} parent=0 // pred_check_branch
    %15 = sbr.rel (0) target = $region5
  $region4: #{mnist_mlp_forward.1} parent=0 // pred_region
    _
  $region5: #{mnist_mlp_forward.1} parent=0 // pred_fallthru
    _
  // Predicated region
  $region6: #{mnist_mlp_forward.1} parent=0 // pred_check
    _
  $region7: #{mnist_mlp_forward.1} parent=0 // pred_check_branch
    %17 = sbr.rel (0) target = $region9
  $region8: #{mnist_mlp_forward.1} parent=0 // pred_region
    _
  $region9: #{mnist_mlp_forward.1} parent=0 // pred_fallthru
    _
  // Predicated region
  $region10: #{mnist_mlp_forward.1} parent=0 // pred_check
    _
  $region11: #{mnist_mlp_forward.1} parent=0 // pred_check_branch
    %19 = sbr.rel (0) target = $region13
  $region12: #{mnist_mlp_forward.1} parent=0 // pred_region
    _
  $region13: #{mnist_mlp_forward.1} parent=0 // pred_fallthru
    _
  // Predicated region
  $region14: #{mnist_mlp_forward.1} parent=0 // pred_check
    _
  $region15: #{mnist_mlp_forward.1} parent=0 // pred_check_branch
    %21 = sbr.rel (0) target = $region17
  $region16: #{mnist_mlp_forward.1} parent=0 // pred_region
    _
  $region17: #{mnist_mlp_forward.1} parent=0 // pred_fallthru
    _
  // Predicated region
  $region18: #{mnist_mlp_forward.1} parent=0 // pred_check
    _
  $region19: #{mnist_mlp_forward.1} parent=0 // pred_check_branch
    %23 = sbr.rel (0) target = $region21
  $region20: #{mnist_mlp_forward.1} parent=0 // pred_region
    _
  $region21: #{mnist_mlp_forward.1} parent=0 // pred_fallthru
    _
  // Predicated region
  $region22: #{mnist_mlp_forward.1} parent=0 // pred_check
    _
  $region23: #{mnist_mlp_forward.1} parent=0 // pred_check_branch
    %25 = sbr.rel (0) target = $region25
  $region24: #{mnist_mlp_forward.1} parent=0 // pred_region
    _
  $region25: #{mnist_mlp_forward.1} parent=0 // pred_fallthru
    _
  // Predicated region
  $region26: #{mnist_mlp_forward.1} parent=0 // pred_check
    _
  $region27: #{mnist_mlp_forward.1} parent=0 // pred_check_branch
    %27 = sbr.rel (0) target = $region29
  $region28: #{mnist_mlp_forward.1} parent=0 // pred_region
    _
  $region29: #{mnist_mlp_forward.1} parent=0 // pred_fallthru
    _
  // Predicated region
  $region30: #{mnist_mlp_forward.1} parent=0 // pred_check
    _
  $region31: #{mnist_mlp_forward.1} parent=0 // pred_check_branch
    %29 = sbr.rel (0) target = $region33
  $region32: #{mnist_mlp_forward.1} parent=0 // pred_region
    _
  $region33: #{mnist_mlp_forward.1} parent=0 // pred_fallthru
    _
  // Predicated region
  $region34: #{mnist_mlp_forward.1} parent=0 // pred_check
    _
  $region35: #{mnist_mlp_forward.1} parent=0 // pred_check_branch
    %31 = sbr.rel (0) target = $region37
  $region36: #{mnist_mlp_forward.1} parent=0 // pred_region
    _
  $region37: #{mnist_mlp_forward.1} parent=0 // pred_fallthru
    _
  %v33 = vld [vmem:[%s0] sm:$0xff]
  %v34 = vld [vmem:[%s0 + $0x8] sm:$0xff]
  %v35 = vld [vmem:[%s0 + $0x10] sm:$0xff]
  %v36 = vld [vmem:[%s0 + $0x18] sm:$0xff]
  %v37 = vld [vmem:[%s0 + $0x20] sm:$0xff]
  %v38 = vld [vmem:[%s0 + $0x28] sm:$0xff]
  %v39 = vld [vmem:[%s0 + $0x30] sm:$0xff]
  %v40 = vpack.c.bf16 %v33, %v33
  %v41 = vpack.c.bf16 %v34, %v34
  %v42 = vpack.c.bf16 %v35, %v35
  %v43 = vpack.c.bf16 %v36, %v36
  %v44 = vpack.c.bf16 %v37, %v37
  %v45 = vpack.c.bf16 %v38, %v38
  %v46 = vpack.c.bf16 %v39, %v39
  %v47 = vld [vmem:[%s1] sm:$0xf]
  %v48 = vld [vmem:[%s1 + $0x4] sm:$0xf]
  %v49 = vld [vmem:[%s1 + $0x8] sm:$0xf]
  %v50 = vld [vmem:[%s1 + $0xc] sm:$0xf]
  %v51 = vld [vmem:[%s1 + $0x10] sm:$0xf]
  %v52 = vld [vmem:[%s1 + $0x14] sm:$0xf]
  %v53 = vld [vmem:[%s1 + $0x18] sm:$0xf]
  %v54 = vld [vmem:[%s1 + $0x1c] sm:$0xf]
  %v55 = vld [vmem:[%s1 + $0x20] sm:$0xf]
  %v56 = vld [vmem:[%s1 + $0x24] sm:$0xf]
  %v57 = vld [vmem:[%s1 + $0x28] sm:$0xf]
  %v58 = vld [vmem:[%s1 + $0x2c] sm:$0xf]
  %v59 = vld [vmem:[%s1 + $0x30] sm:$0xf]
  %v60 = vld [vmem:[%s1 + $0x34] sm:$0xf]
  %v61 = vld [vmem:[%s1 + $0x38] sm:$0xf]
  %v62 = vld [vmem:[%s1 + $0x3c] sm:$0xf]
  %v63 = vld [vmem:[%s1 + $0x40] sm:$0xf]
  %v64 = vld [vmem:[%s1 + $0x44] sm:$0xf]
  %v65 = vld [vmem:[%s1 + $0x48] sm:$0xf]
  %v66 = vld [vmem:[%s1 + $0x4c] sm:$0xf]
  %v67 = vld [vmem:[%s1 + $0x50] sm:$0xf]
  %v68 = vld [vmem:[%s1 + $0x54] sm:$0xf]
  %v69 = vld [vmem:[%s1 + $0x58] sm:$0xf]
  %v70 = vld [vmem:[%s1 + $0x5c] sm:$0xf]
  %v71 = vld [vmem:[%s1 + $0x60] sm:$0xf]
  %v72 = vld [vmem:[%s1 + $0x64] sm:$0xf]
  %v73 = vld [vmem:[%s1 + $0x68] sm:$0xf]
  %v74 = vld [vmem:[%s1 + $0x6c] sm:$0xf]
  %v75 = vld [vmem:[%s1 + $0x70] sm:$0xf]
  %v76 = vld [vmem:[%s1 + $0x74] sm:$0xf]
  %v77 = vld [vmem:[%s1 + $0x78] sm:$0xf]
  %v78 = vld [vmem:[%s1 + $0x7c] sm:$0xf]
  %v79 = vld [vmem:[%s1 + $0x80] sm:$0xf]
  %v80 = vld [vmem:[%s1 + $0x84] sm:$0xf]
  %v81 = vld [vmem:[%s1 + $0x88] sm:$0xf]
  %v82 = vld [vmem:[%s1 + $0x8c] sm:$0xf]
  %v83 = vld [vmem:[%s1 + $0x90] sm:$0xf]
  %v84 = vld [vmem:[%s1 + $0x94] sm:$0xf]
  %v85 = vld [vmem:[%s1 + $0x98] sm:$0xf]
  %v86 = vld [vmem:[%s1 + $0x9c] sm:$0xf]
  %v87 = vld [vmem:[%s1 + $0xa0] sm:$0xf]
  %v88 = vld [vmem:[%s1 + $0xa4] sm:$0xf]
  %v89 = vld [vmem:[%s1 + $0xa8] sm:$0xf]
  %v90 = vld [vmem:[%s1 + $0xac] sm:$0xf]
  %v91 = vld [vmem:[%s1 + $0xb0] sm:$0xf]
  %v92 = vld [vmem:[%s1 + $0xb4] sm:$0xf]
  %v93 = vld [vmem:[%s1 + $0xb8] sm:$0xf]
  %v94 = vld [vmem:[%s1 + $0xbc] sm:$0xf]
  %v95 = vld [vmem:[%s1 + $0xc0] sm:$0xf]
  %v96 = vld [vmem:[%s1 + $0xc4] sm:$0xf]
  %v97 = vld [vmem:[%s1 + $0xc8] sm:$0xf]
  %v98 = vld [vmem:[%s1 + $0xcc] sm:$0xf]
  %v99 = vld [vmem:[%s1 + $0xd0] sm:$0xf]
  %v100 = vld [vmem:[%s1 + $0xd4] sm:$0xf]
  %v101 = vld [vmem:[%s1 + $0xd8] sm:$0xf]
  %v102 = vld [vmem:[%s1 + $0xdc] sm:$0xf]
  %v103 = vld [vmem:[%s1 + $0xe0] sm:$0xf]
  %v104 = vld [vmem:[%s1 + $0xe4] sm:$0xf]
  %v105 = vld [vmem:[%s1 + $0xe8] sm:$0xf]
  %v106 = vld [vmem:[%s1 + $0xec] sm:$0xf]
  %v107 = vld [vmem:[%s1 + $0xf0] sm:$0xf]
  %v108 = vld [vmem:[%s1 + $0xf4] sm:$0xf]
  %v109 = vld [vmem:[%s1 + $0xf8] sm:$0xf]
  %v110 = vld [vmem:[%s1 + $0xfc] sm:$0xf]
  %v111 = vld [vmem:[%s1 + $0x100] sm:$0xf]
  %v112 = vld [vmem:[%s1 + $0x104] sm:$0xf]
  %v113 = vld [vmem:[%s1 + $0x108] sm:$0xf]
  %v114 = vld [vmem:[%s1 + $0x10c] sm:$0xf]
  %v115 = vld [vmem:[%s1 + $0x110] sm:$0xf]
  %v116 = vld [vmem:[%s1 + $0x114] sm:$0xf]
  %v117 = vld [vmem:[%s1 + $0x118] sm:$0xf]
  %v118 = vld [vmem:[%s1 + $0x11c] sm:$0xf]
  %v119 = vld [vmem:[%s1 + $0x120] sm:$0xf]
  %v120 = vld [vmem:[%s1 + $0x124] sm:$0xf]
  %v121 = vld [vmem:[%s1 + $0x128] sm:$0xf]
  %v122 = vld [vmem:[%s1 + $0x12c] sm:$0xf]
  %v123 = vld [vmem:[%s1 + $0x130] sm:$0xf]
  %v124 = vld [vmem:[%s1 + $0x134] sm:$0xf]
  %v125 = vld [vmem:[%s1 + $0x138] sm:$0xf]
  %v126 = vld [vmem:[%s1 + $0x13c] sm:$0xf]
  %v127 = vld [vmem:[%s1 + $0x140] sm:$0xf]
  %v128 = vld [vmem:[%s1 + $0x144] sm:$0xf]
  %v129 = vld [vmem:[%s1 + $0x148] sm:$0xf]
  %v130 = vld [vmem:[%s1 + $0x14c] sm:$0xf]
  %v131 = vld [vmem:[%s1 + $0x150] sm:$0xf]
  %v132 = vld [vmem:[%s1 + $0x154] sm:$0xf]
  %v133 = vld [vmem:[%s1 + $0x158] sm:$0xf]
  %v134 = vld [vmem:[%s1 + $0x15c] sm:$0xf]
  %v135 = vld [vmem:[%s1 + $0x160] sm:$0xf]
  %v136 = vld [vmem:[%s1 + $0x164] sm:$0xf]
  %v137 = vld [vmem:[%s1 + $0x168] sm:$0xf]
  %v138 = vld [vmem:[%s1 + $0x16c] sm:$0xf]
  %v139 = vld [vmem:[%s1 + $0x170] sm:$0xf]
  %v140 = vld [vmem:[%s1 + $0x174] sm:$0xf]
  %v141 = vld [vmem:[%s1 + $0x178] sm:$0xf]
  %v142 = vld [vmem:[%s1 + $0x17c] sm:$0xf]
  %v143 = vld [vmem:[%s1 + $0x180] sm:$0xf]
  %v144 = vld [vmem:[%s1 + $0x184] sm:$0xf]
  %v145 = vld [vmem:[%s2] sm:$0x1]
  %v147 = vlaneseq
  %v148 = vshrl.u32 %v147, 7
  %v149 = vsub.s32 0, %v148
  %v150 = vrot.slane %v145, %v149
  %v250 = vunpack.c.l.b16 %v47
  %v251 = vunpack.c.l.b16 %v48
  %v252 = vunpack.c.l.b16 %v49
  %v253 = vunpack.c.l.b16 %v50
  %v254 = vunpack.c.l.b16 %v51
  %v255 = vunpack.c.l.b16 %v52
  %v256 = vunpack.c.l.b16 %v53
  %v257 = vunpack.c.l.b16 %v54
  %v258 = vunpack.c.l.b16 %v55
  %v259 = vunpack.c.l.b16 %v56
  %v260 = vunpack.c.l.b16 %v57
  %v261 = vunpack.c.l.b16 %v58
  %v262 = vunpack.c.l.b16 %v59
  %v263 = vunpack.c.l.b16 %v60
  %v264 = vunpack.c.l.b16 %v61
  %v265 = vunpack.c.l.b16 %v62
  %v266 = vunpack.c.l.b16 %v63
  %v267 = vunpack.c.l.b16 %v64
  %v268 = vunpack.c.l.b16 %v65
  %v269 = vunpack.c.l.b16 %v66
  %v270 = vunpack.c.l.b16 %v67
  %v271 = vunpack.c.l.b16 %v68
  %v272 = vunpack.c.l.b16 %v69
  %v273 = vunpack.c.l.b16 %v70
  %v274 = vunpack.c.l.b16 %v71
  %v275 = vunpack.c.l.b16 %v72
  %v276 = vunpack.c.l.b16 %v73
  %v277 = vunpack.c.l.b16 %v74
  %v278 = vunpack.c.l.b16 %v75
  %v279 = vunpack.c.l.b16 %v76
  %v280 = vunpack.c.l.b16 %v77
  %v281 = vunpack.c.l.b16 %v78
  %v282 = vunpack.c.l.b16 %v79
  %v283 = vunpack.c.l.b16 %v80
  %v284 = vunpack.c.l.b16 %v81
  %v285 = vunpack.c.l.b16 %v82
  %v286 = vunpack.c.l.b16 %v83
  %v287 = vunpack.c.l.b16 %v84
  %v288 = vunpack.c.l.b16 %v85
  %v289 = vunpack.c.l.b16 %v86
  %v290 = vunpack.c.l.b16 %v87
  %v291 = vunpack.c.l.b16 %v88
  %v292 = vunpack.c.l.b16 %v89
  %v293 = vunpack.c.l.b16 %v90
  %v294 = vunpack.c.l.b16 %v91
  %v295 = vunpack.c.l.b16 %v92
  %v296 = vunpack.c.l.b16 %v93
  %v297 = vunpack.c.l.b16 %v94
  %v298 = vunpack.c.l.b16 %v95
  %v299 = vunpack.c.l.b16 %v96
  %v300 = vunpack.c.l.b16 %v97
  %v301 = vunpack.c.l.b16 %v98
  %v302 = vunpack.c.l.b16 %v99
  %v303 = vunpack.c.l.b16 %v100
  %v304 = vunpack.c.l.b16 %v101
  %v305 = vunpack.c.l.b16 %v102
  %v306 = vunpack.c.l.b16 %v103
  %v307 = vunpack.c.l.b16 %v104
  %v308 = vunpack.c.l.b16 %v105
  %v309 = vunpack.c.l.b16 %v106
  %v310 = vunpack.c.l.b16 %v107
  %v311 = vunpack.c.l.b16 %v108
  %v312 = vunpack.c.l.b16 %v109
  %v313 = vunpack.c.l.b16 %v110
  %v314 = vunpack.c.l.b16 %v111
  %v315 = vunpack.c.l.b16 %v112
  %v316 = vunpack.c.l.b16 %v113
  %v317 = vunpack.c.l.b16 %v114
  %v318 = vunpack.c.l.b16 %v115
  %v319 = vunpack.c.l.b16 %v116
  %v320 = vunpack.c.l.b16 %v117
  %v321 = vunpack.c.l.b16 %v118
  %v322 = vunpack.c.l.b16 %v119
  %v323 = vunpack.c.l.b16 %v120
  %v324 = vunpack.c.l.b16 %v121
  %v325 = vunpack.c.l.b16 %v122
  %v326 = vunpack.c.l.b16 %v123
  %v327 = vunpack.c.l.b16 %v124
  %v328 = vunpack.c.l.b16 %v125
  %v329 = vunpack.c.l.b16 %v126
  %v330 = vunpack.c.l.b16 %v127
  %v331 = vunpack.c.l.b16 %v128
  %v332 = vunpack.c.l.b16 %v129
  %v333 = vunpack.c.l.b16 %v130
  %v334 = vunpack.c.l.b16 %v131
  %v335 = vunpack.c.l.b16 %v132
  %v336 = vunpack.c.l.b16 %v133
  %v337 = vunpack.c.l.b16 %v134
  %v338 = vunpack.c.l.b16 %v135
  %v339 = vunpack.c.l.b16 %v136
  %v340 = vunpack.c.l.b16 %v137
  %v341 = vunpack.c.l.b16 %v138
  %v342 = vunpack.c.l.b16 %v139
  %v343 = vunpack.c.l.b16 %v140
  %v344 = vunpack.c.l.b16 %v141
  %v345 = vunpack.c.l.b16 %v142
  %v346 = vunpack.c.l.b16 %v143
  %v347 = vunpack.c.l.b16 %v144
  %v348 = vpack.c.b16 %v251, %v250
  %v349 = vpack.c.b16 %v253, %v252
  %v350 = vpack.c.b16 %v255, %v254
  %v351 = vpack.c.b16 %v257, %v256
  %v352 = vpack.c.b16 %v259, %v258
  %v353 = vpack.c.b16 %v261, %v260
  %v354 = vpack.c.b16 %v263, %v262
  %v355 = vpack.c.b16 %v265, %v264
  %v356 = vpack.c.b16 %v267, %v266
  %v357 = vpack.c.b16 %v269, %v268
  %v358 = vpack.c.b16 %v271, %v270
  %v359 = vpack.c.b16 %v273, %v272
  %v360 = vpack.c.b16 %v275, %v274
  %v361 = vpack.c.b16 %v277, %v276
  %v362 = vpack.c.b16 %v279, %v278
  %v363 = vpack.c.b16 %v281, %v280
  %v364 = vpack.c.b16 %v283, %v282
  %v365 = vpack.c.b16 %v285, %v284
  %v366 = vpack.c.b16 %v287, %v286
  %v367 = vpack.c.b16 %v289, %v288
  %v368 = vpack.c.b16 %v291, %v290
  %v369 = vpack.c.b16 %v293, %v292
  %v370 = vpack.c.b16 %v295, %v294
  %v371 = vpack.c.b16 %v297, %v296
  %v372 = vpack.c.b16 %v299, %v298
  %v373 = vpack.c.b16 %v301, %v300
  %v374 = vpack.c.b16 %v303, %v302
  %v375 = vpack.c.b16 %v305, %v304
  %v376 = vpack.c.b16 %v307, %v306
  %v377 = vpack.c.b16 %v309, %v308
  %v378 = vpack.c.b16 %v311, %v310
  %v379 = vpack.c.b16 %v313, %v312
  %v380 = vpack.c.b16 %v315, %v314
  %v381 = vpack.c.b16 %v317, %v316
  %v382 = vpack.c.b16 %v319, %v318
  %v383 = vpack.c.b16 %v321, %v320
  %v384 = vpack.c.b16 %v323, %v322
  %v385 = vpack.c.b16 %v325, %v324
  %v386 = vpack.c.b16 %v327, %v326
  %v387 = vpack.c.b16 %v329, %v328
  %v388 = vpack.c.b16 %v331, %v330
  %v389 = vpack.c.b16 %v333, %v332
  %v390 = vpack.c.b16 %v335, %v334
  %v391 = vpack.c.b16 %v337, %v336
  %v392 = vpack.c.b16 %v339, %v338
  %v393 = vpack.c.b16 %v341, %v340
  %v394 = vpack.c.b16 %v343, %v342
  %v395 = vpack.c.b16 %v345, %v344
  %v396 = vpack.c.b16 %v347, %v346
  %vm446 = vcmask 130048
  %v448 = vsel %vm446, %v46, 0
  %450 = vmatprep.subr.bf16.mxu0 0
  %451 = vmatpush1.bf16.msra.mxu0 %v348
  %452 = vmatprep.subr.bf16.mxu0 0
  %453 = vmatpush1.bf16.msra.mxu0 %v349
  %454 = vmatprep.subr.bf16.mxu0 0
  %455 = vmatpush1.bf16.msra.mxu0 %v350
  %456 = vmatprep.subr.bf16.mxu0 0
  %457 = vmatpush1.bf16.msra.mxu0 %v351
  %458 = vmatprep.subr.bf16.mxu0 0
  %459 = vmatpush1.bf16.msra.mxu0 %v352
  %460 = vmatprep.subr.bf16.mxu0 0
  %461 = vmatpush1.bf16.msra.mxu0 %v353
  %462 = vmatprep.subr.bf16.mxu0 0
  %463 = vmatpush1.bf16.msra.mxu0 %v354
  %464 = vmatprep.subr.bf16.mxu0 0
  %465 = vmatpush1.bf16.msra.mxu0 %v355
  %466 = vmatprep.subr.bf16.mxu0 0
  %467 = vmatpush1.bf16.msra.mxu0 %v356
  %468 = vmatprep.subr.bf16.mxu0 0
  %469 = vmatpush1.bf16.msra.mxu0 %v357
  %470 = vmatprep.subr.bf16.mxu0 0
  %471 = vmatpush1.bf16.msra.mxu0 %v358
  %472 = vmatprep.subr.bf16.mxu0 0
  %473 = vmatpush1.bf16.msra.mxu0 %v359
  %474 = vmatprep.subr.bf16.mxu0 0
  %475 = vmatpush1.bf16.msra.mxu0 %v360
  %476 = vmatprep.subr.bf16.mxu0 0
  %477 = vmatpush1.bf16.msra.mxu0 %v361
  %478 = vmatprep.subr.bf16.mxu0 0
  %479 = vmatpush1.bf16.msra.mxu0 %v362
  %480 = vmatprep.subr.bf16.mxu0 0
  %481 = vmatpush1.bf16.msra.mxu0 %v363
  %482 = vmatprep.mubr.bf16.mxu0 %v41
  %483 = vmatmul.mubr.bf16.gmra.mrb[0].mxu0 %v40
  %v484 = vpop.f32.mrb[0].mxu0
  %v485 = vadd.f32 %v150, %v484
  %v486 = vpop.f32.mrb[0].mxu0
  %v487 = vpop.f32.mrb[0].mxu0
  %v488 = vpop.f32.mrb[0].mxu0
  %489 = vdwg.mxu0
  %490 = vmatprep.subr.bf16.mxu0 0
  %491 = vmatpush1.bf16.msra.mxu0 %v364
  %492 = vmatprep.subr.bf16.mxu0 0
  %493 = vmatpush1.bf16.msra.mxu0 %v365
  %494 = vmatprep.subr.bf16.mxu0 0
  %495 = vmatpush1.bf16.msra.mxu0 %v366
  %496 = vmatprep.subr.bf16.mxu0 0
  %497 = vmatpush1.bf16.msra.mxu0 %v367
  %498 = vmatprep.subr.bf16.mxu0 0
  %499 = vmatpush1.bf16.msra.mxu0 %v368
  %500 = vmatprep.subr.bf16.mxu0 0
  %501 = vmatpush1.bf16.msra.mxu0 %v369
  %502 = vmatprep.subr.bf16.mxu0 0
  %503 = vmatpush1.bf16.msra.mxu0 %v370
  %504 = vmatprep.subr.bf16.mxu0 0
  %505 = vmatpush1.bf16.msra.mxu0 %v371
  %506 = vmatprep.subr.bf16.mxu0 0
  %507 = vmatpush1.bf16.msra.mxu0 %v372
  %508 = vmatprep.subr.bf16.mxu0 0
  %509 = vmatpush1.bf16.msra.mxu0 %v373
  %510 = vmatprep.subr.bf16.mxu0 0
  %511 = vmatpush1.bf16.msra.mxu0 %v374
  %512 = vmatprep.subr.bf16.mxu0 0
  %513 = vmatpush1.bf16.msra.mxu0 %v375
  %514 = vmatprep.subr.bf16.mxu0 0
  %515 = vmatpush1.bf16.msra.mxu0 %v376
  %516 = vmatprep.subr.bf16.mxu0 0
  %517 = vmatpush1.bf16.msra.mxu0 %v377
  %518 = vmatprep.subr.bf16.mxu0 0
  %519 = vmatpush1.bf16.msra.mxu0 %v378
  %520 = vmatprep.subr.bf16.mxu0 0
  %521 = vmatpush1.bf16.msra.mxu0 %v379
  %522 = vmatprep.mubr.bf16.mxu0 %v43
  %523 = vmatmul.mubr.bf16.gmra.mrb[0].mxu0 %v42
  %v524 = vpop.f32.mrb[0].mxu0
  %v525 = vadd.f32 %v485, %v524
  %v526 = vpop.f32.mrb[0].mxu0
  %v527 = vpop.f32.mrb[0].mxu0
  %v528 = vpop.f32.mrb[0].mxu0
  %529 = vdwg.mxu0
  %530 = vmatprep.subr.bf16.mxu0 0
  %531 = vmatpush1.bf16.msra.mxu0 %v380
  %532 = vmatprep.subr.bf16.mxu0 0
  %533 = vmatpush1.bf16.msra.mxu0 %v381
  %534 = vmatprep.subr.bf16.mxu0 0
  %535 = vmatpush1.bf16.msra.mxu0 %v382
  %536 = vmatprep.subr.bf16.mxu0 0
  %537 = vmatpush1.bf16.msra.mxu0 %v383
  %538 = vmatprep.subr.bf16.mxu0 0
  %539 = vmatpush1.bf16.msra.mxu0 %v384
  %540 = vmatprep.subr.bf16.mxu0 0
  %541 = vmatpush1.bf16.msra.mxu0 %v385
  %542 = vmatprep.subr.bf16.mxu0 0
  %543 = vmatpush1.bf16.msra.mxu0 %v386
  %544 = vmatprep.subr.bf16.mxu0 0
  %545 = vmatpush1.bf16.msra.mxu0 %v387
  %546 = vmatprep.subr.bf16.mxu0 0
  %547 = vmatpush1.bf16.msra.mxu0 %v388
  %548 = vmatprep.subr.bf16.mxu0 0
  %549 = vmatpush1.bf16.msra.mxu0 %v389
  %550 = vmatprep.subr.bf16.mxu0 0
  %551 = vmatpush1.bf16.msra.mxu0 %v390
  %552 = vmatprep.subr.bf16.mxu0 0
  %553 = vmatpush1.bf16.msra.mxu0 %v391
  %554 = vmatprep.subr.bf16.mxu0 0
  %555 = vmatpush1.bf16.msra.mxu0 %v392
  %556 = vmatprep.subr.bf16.mxu0 0
  %557 = vmatpush1.bf16.msra.mxu0 %v393
  %558 = vmatprep.subr.bf16.mxu0 0
  %559 = vmatpush1.bf16.msra.mxu0 %v394
  %560 = vmatprep.subr.bf16.mxu0 0
  %561 = vmatpush1.bf16.msra.mxu0 %v395
  %562 = vmatprep.mubr.bf16.mxu0 %v45
  %563 = vmatmul.mubr.bf16.gmra.mrb[0].mxu0 %v44
  %v564 = vpop.f32.mrb[0].mxu0
  %v565 = vadd.f32 %v525, %v564
  %v566 = vpop.f32.mrb[0].mxu0
  %v567 = vpop.f32.mrb[0].mxu0
  %v568 = vpop.f32.mrb[0].mxu0
  %569 = vdwg.mxu0
  %570 = vmatprep.subr.bf16.mxu0 0
  %571 = vmatpush1.bf16.msra.mxu0 %v396
  %572 = vmatprep.subr.bf16.mxu0 0
  %573 = vmatpush1.bf16.msra.mxu0 0
  %574 = vmatprep.subr.bf16.mxu0 0
  %575 = vmatpush1.bf16.msra.mxu0 0
  %576 = vmatprep.subr.bf16.mxu0 0
  %577 = vmatpush1.bf16.msra.mxu0 0
  %578 = vmatprep.subr.bf16.mxu0 0
  %579 = vmatpush1.bf16.msra.mxu0 0
  %580 = vmatprep.subr.bf16.mxu0 0
  %581 = vmatpush1.bf16.msra.mxu0 0
  %582 = vmatprep.subr.bf16.mxu0 0
  %583 = vmatpush1.bf16.msra.mxu0 0
  %584 = vmatprep.subr.bf16.mxu0 0
  %585 = vmatpush1.bf16.msra.mxu0 0
  %586 = vmatprep.subr.bf16.mxu0 0
  %587 = vmatpush1.bf16.msra.mxu0 0
  %588 = vmatprep.subr.bf16.mxu0 0
  %589 = vmatpush1.bf16.msra.mxu0 0
  %590 = vmatprep.subr.bf16.mxu0 0
  %591 = vmatpush1.bf16.msra.mxu0 0
  %592 = vmatprep.subr.bf16.mxu0 0
  %593 = vmatpush1.bf16.msra.mxu0 0
  %594 = vmatprep.subr.bf16.mxu0 0
  %595 = vmatpush1.bf16.msra.mxu0 0
  %596 = vmatprep.subr.bf16.mxu0 0
  %597 = vmatpush1.bf16.msra.mxu0 0
  %598 = vmatprep.subr.bf16.mxu0 0
  %599 = vmatpush1.bf16.msra.mxu0 0
  %600 = vmatprep.subr.bf16.mxu0 0
  %601 = vmatpush1.bf16.msra.mxu0 0
  %602 = vmatprep.mubr.bf16.mxu0 0
  %603 = vmatmul.mubr.bf16.gmra.mrb[0].mxu0 %v448
  %v604 = vpop.f32.mrb[0].mxu0
  %v605 = vadd.f32 %v565, %v604
  %v606 = vpop.f32.mrb[0].mxu0
  %v607 = vpop.f32.mrb[0].mxu0
  %v608 = vpop.f32.mrb[0].mxu0
  %609 = vdwg.mxu0
  %v610 = vmax.f32 %v605, 0.0
  %v611 = vpack.c.bf16 %v610, %v610
  %v612 = vld [vmem:[%s3] sm:$0xff]
  %v613 = vld [vmem:[%s3 + $0x8] sm:$0xff]
  %v614 = vld [vmem:[%s3 + $0x10] sm:$0xff]
  %v615 = vld [vmem:[%s3 + $0x18] sm:$0xff]
  %v616 = vld [vmem:[%s3 + $0x20] sm:$0xff]
  %v617 = vld [vmem:[%s3 + $0x28] sm:$0xff]
  %v618 = vld [vmem:[%s3 + $0x30] sm:$0xff]
  %v619 = vld [vmem:[%s3 + $0x38] sm:$0xff]
  %v620 = vld [vmem:[%s3 + $0x40] sm:$0xff]
  %v621 = vld [vmem:[%s3 + $0x48] sm:$0xff]
  %v622 = vld [vmem:[%s3 + $0x50] sm:$0xff]
  %v623 = vld [vmem:[%s3 + $0x58] sm:$0xff]
  %v624 = vld [vmem:[%s3 + $0x60] sm:$0xff]
  %v625 = vld [vmem:[%s3 + $0x68] sm:$0xff]
  %v626 = vld [vmem:[%s3 + $0x70] sm:$0xff]
  %v627 = vld [vmem:[%s3 + $0x78] sm:$0xff]
  %v628 = vld [vmem:[%s4] sm:$0x3]
  %v630 = vlaneseq
  %v631 = vshrl.u32 %v630, 7
  %v632 = vsub.s32 0, %v631
  %v633 = vrot.slane %v628, %v632
  %v634 = vlaneseq
  %v635 = vshrl.u32 %v634, 7
  %v636 = vsub.s32 1, %v635
  %v637 = vrot.slane %v628, %v636
  %v656 = vunpack.c.l.b16 %v612
  %v657 = vunpack.c.h.b16 %v612
  %v658 = vunpack.c.l.b16 %v613
  %v659 = vunpack.c.h.b16 %v613
  %v660 = vunpack.c.l.b16 %v614
  %v661 = vunpack.c.h.b16 %v614
  %v662 = vunpack.c.l.b16 %v615
  %v663 = vunpack.c.h.b16 %v615
  %v664 = vunpack.c.l.b16 %v616
  %v665 = vunpack.c.h.b16 %v616
  %v666 = vunpack.c.l.b16 %v617
  %v667 = vunpack.c.h.b16 %v617
  %v668 = vunpack.c.l.b16 %v618
  %v669 = vunpack.c.h.b16 %v618
  %v670 = vunpack.c.l.b16 %v619
  %v671 = vunpack.c.h.b16 %v619
  %v672 = vunpack.c.l.b16 %v620
  %v673 = vunpack.c.h.b16 %v620
  %v674 = vunpack.c.l.b16 %v621
  %v675 = vunpack.c.h.b16 %v621
  %v676 = vunpack.c.l.b16 %v622
  %v677 = vunpack.c.h.b16 %v622
  %v678 = vunpack.c.l.b16 %v623
  %v679 = vunpack.c.h.b16 %v623
  %v680 = vunpack.c.l.b16 %v624
  %v681 = vunpack.c.h.b16 %v624
  %v682 = vunpack.c.l.b16 %v625
  %v683 = vunpack.c.h.b16 %v625
  %v684 = vunpack.c.l.b16 %v626
  %v685 = vunpack.c.h.b16 %v626
  %v686 = vunpack.c.l.b16 %v627
  %v687 = vunpack.c.h.b16 %v627
  %v688 = vpack.c.b16 %v658, %v656
  %v689 = vpack.c.b16 %v659, %v657
  %v690 = vpack.c.b16 %v662, %v660
  %v691 = vpack.c.b16 %v663, %v661
  %v692 = vpack.c.b16 %v666, %v664
  %v693 = vpack.c.b16 %v667, %v665
  %v694 = vpack.c.b16 %v670, %v668
  %v695 = vpack.c.b16 %v671, %v669
  %v696 = vpack.c.b16 %v674, %v672
  %v697 = vpack.c.b16 %v675, %v673
  %v698 = vpack.c.b16 %v678, %v676
  %v699 = vpack.c.b16 %v679, %v677
  %v700 = vpack.c.b16 %v682, %v680
  %v701 = vpack.c.b16 %v683, %v681
  %v702 = vpack.c.b16 %v686, %v684
  %v703 = vpack.c.b16 %v687, %v685
  %720 = vmatprep.subr.bf16.mxu0 %v689
  %721 = vmatpush1.bf16.msra.mxu0 %v688
  %722 = vmatprep.subr.bf16.mxu0 %v691
  %723 = vmatpush1.bf16.msra.mxu0 %v690
  %724 = vmatprep.subr.bf16.mxu0 %v693
  %725 = vmatpush1.bf16.msra.mxu0 %v692
  %726 = vmatprep.subr.bf16.mxu0 %v695
  %727 = vmatpush1.bf16.msra.mxu0 %v694
  %728 = vmatprep.subr.bf16.mxu0 %v697
  %729 = vmatpush1.bf16.msra.mxu0 %v696
  %730 = vmatprep.subr.bf16.mxu0 %v699
  %731 = vmatpush1.bf16.msra.mxu0 %v698
  %732 = vmatprep.subr.bf16.mxu0 %v701
  %733 = vmatpush1.bf16.msra.mxu0 %v700
  %734 = vmatprep.subr.bf16.mxu0 %v703
  %735 = vmatpush1.bf16.msra.mxu0 %v702
  %736 = vmatprep.subr.bf16.mxu0 0
  %737 = vmatpush1.bf16.msra.mxu0 0
  %738 = vmatprep.subr.bf16.mxu0 0
  %739 = vmatpush1.bf16.msra.mxu0 0
  %740 = vmatprep.subr.bf16.mxu0 0
  %741 = vmatpush1.bf16.msra.mxu0 0
  %742 = vmatprep.subr.bf16.mxu0 0
  %743 = vmatpush1.bf16.msra.mxu0 0
  %744 = vmatprep.subr.bf16.mxu0 0
  %745 = vmatpush1.bf16.msra.mxu0 0
  %746 = vmatprep.subr.bf16.mxu0 0
  %747 = vmatpush1.bf16.msra.mxu0 0
  %748 = vmatprep.subr.bf16.mxu0 0
  %749 = vmatpush1.bf16.msra.mxu0 0
  %750 = vmatprep.subr.bf16.mxu0 0
  %751 = vmatpush1.bf16.msra.mxu0 0
  %752 = vmatprep.mubr.bf16.mxu0 0
  %753 = vmatmul.mubr.bf16.gmra.mrb[0].mxu0 %v611
  %v754 = vpop.f32.mrb[0].mxu0
  %v755 = vadd.f32 %v633, %v754
  %v756 = vpop.f32.mrb[0].mxu0
  %v757 = vadd.f32 %v637, %v756
  %v758 = vpop.f32.mrb[0].mxu0
  %v759 = vpop.f32.mrb[0].mxu0
  %760 = vdwg.mxu0
  %v761 = vmax.f32 %v755, 0.0
  %v762 = vmax.f32 %v757, 0.0
  %v763 = vpack.c.bf16 %v761, %v761
  %v764 = vpack.c.bf16 %v762, %v762
  %v765 = vld [vmem:[%s5] sm:$0xf]
  %v766 = vld [vmem:[%s5 + $0x4] sm:$0xf]
  %v767 = vld [vmem:[%s5 + $0x8] sm:$0xf]
  %v768 = vld [vmem:[%s5 + $0xc] sm:$0xf]
  %v769 = vld [vmem:[%s5 + $0x10] sm:$0xf]
  %v770 = vld [vmem:[%s5 + $0x14] sm:$0xf]
  %v771 = vld [vmem:[%s5 + $0x18] sm:$0xf]
  %v772 = vld [vmem:[%s5 + $0x1c] sm:$0xf]
  %v773 = vld [vmem:[%s5 + $0x20] sm:$0xf]
  %v774 = vld [vmem:[%s5 + $0x24] sm:$0xf]
  %v775 = vld [vmem:[%s5 + $0x28] sm:$0xf]
  %v776 = vld [vmem:[%s5 + $0x2c] sm:$0xf]
  %v777 = vld [vmem:[%s5 + $0x30] sm:$0xf]
  %v778 = vld [vmem:[%s5 + $0x34] sm:$0xf]
  %v779 = vld [vmem:[%s5 + $0x38] sm:$0xf]
  %v780 = vld [vmem:[%s5 + $0x3c] sm:$0xf]
  %v781 = vld [vmem:[%s5 + $0x40] sm:$0xf]
  %v782 = vld [vmem:[%s5 + $0x44] sm:$0xf]
  %v783 = vld [vmem:[%s5 + $0x48] sm:$0xf]
  %v784 = vld [vmem:[%s5 + $0x4c] sm:$0xf]
  %v785 = vld [vmem:[%s5 + $0x50] sm:$0xf]
  %v786 = vld [vmem:[%s5 + $0x54] sm:$0xf]
  %v787 = vld [vmem:[%s5 + $0x58] sm:$0xf]
  %v788 = vld [vmem:[%s5 + $0x5c] sm:$0xf]
  %v789 = vld [vmem:[%s5 + $0x60] sm:$0xf]
  %v790 = vld [vmem:[%s5 + $0x64] sm:$0xf]
  %v791 = vld [vmem:[%s5 + $0x68] sm:$0xf]
  %v792 = vld [vmem:[%s5 + $0x6c] sm:$0xf]
  %v793 = vld [vmem:[%s5 + $0x70] sm:$0xf]
  %v794 = vld [vmem:[%s5 + $0x74] sm:$0xf]
  %v795 = vld [vmem:[%s5 + $0x78] sm:$0xf]
  %v796 = vld [vmem:[%s5 + $0x7c] sm:$0xf]
  %v797 = vld [vmem:[%s6] sm:$0x1]
  %v799 = vlaneseq
  %v800 = vshrl.u32 %v799, 7
  %v801 = vsub.s32 0, %v800
  %v802 = vrot.slane %v797, %v801
  %v836 = vunpack.c.l.b16 %v765
  %v837 = vunpack.c.l.b16 %v766
  %v838 = vunpack.c.l.b16 %v767
  %v839 = vunpack.c.l.b16 %v768
  %v840 = vunpack.c.l.b16 %v769
  %v841 = vunpack.c.l.b16 %v770
  %v842 = vunpack.c.l.b16 %v771
  %v843 = vunpack.c.l.b16 %v772
  %v844 = vunpack.c.l.b16 %v773
  %v845 = vunpack.c.l.b16 %v774
  %v846 = vunpack.c.l.b16 %v775
  %v847 = vunpack.c.l.b16 %v776
  %v848 = vunpack.c.l.b16 %v777
  %v849 = vunpack.c.l.b16 %v778
  %v850 = vunpack.c.l.b16 %v779
  %v851 = vunpack.c.l.b16 %v780
  %v852 = vunpack.c.l.b16 %v781
  %v853 = vunpack.c.l.b16 %v782
  %v854 = vunpack.c.l.b16 %v783
  %v855 = vunpack.c.l.b16 %v784
  %v856 = vunpack.c.l.b16 %v785
  %v857 = vunpack.c.l.b16 %v786
  %v858 = vunpack.c.l.b16 %v787
  %v859 = vunpack.c.l.b16 %v788
  %v860 = vunpack.c.l.b16 %v789
  %v861 = vunpack.c.l.b16 %v790
  %v862 = vunpack.c.l.b16 %v791
  %v863 = vunpack.c.l.b16 %v792
  %v864 = vunpack.c.l.b16 %v793
  %v865 = vunpack.c.l.b16 %v794
  %v866 = vunpack.c.l.b16 %v795
  %v867 = vunpack.c.l.b16 %v796
  %v868 = vpack.c.b16 %v837, %v836
  %v869 = vpack.c.b16 %v839, %v838
  %v870 = vpack.c.b16 %v841, %v840
  %v871 = vpack.c.b16 %v843, %v842
  %v872 = vpack.c.b16 %v845, %v844
  %v873 = vpack.c.b16 %v847, %v846
  %v874 = vpack.c.b16 %v849, %v848
  %v875 = vpack.c.b16 %v851, %v850
  %v876 = vpack.c.b16 %v853, %v852
  %v877 = vpack.c.b16 %v855, %v854
  %v878 = vpack.c.b16 %v857, %v856
  %v879 = vpack.c.b16 %v859, %v858
  %v880 = vpack.c.b16 %v861, %v860
  %v881 = vpack.c.b16 %v863, %v862
  %v882 = vpack.c.b16 %v865, %v864
  %v883 = vpack.c.b16 %v867, %v866
  %900 = vmatprep.subr.bf16.mxu0 0
  %901 = vmatpush1.bf16.msra.mxu0 %v868
  %902 = vmatprep.subr.bf16.mxu0 0
  %903 = vmatpush1.bf16.msra.mxu0 %v869
  %904 = vmatprep.subr.bf16.mxu0 0
  %905 = vmatpush1.bf16.msra.mxu0 %v870
  %906 = vmatprep.subr.bf16.mxu0 0
  %907 = vmatpush1.bf16.msra.mxu0 %v871
  %908 = vmatprep.subr.bf16.mxu0 0
  %909 = vmatpush1.bf16.msra.mxu0 %v872
  %910 = vmatprep.subr.bf16.mxu0 0
  %911 = vmatpush1.bf16.msra.mxu0 %v873
  %912 = vmatprep.subr.bf16.mxu0 0
  %913 = vmatpush1.bf16.msra.mxu0 %v874
  %914 = vmatprep.subr.bf16.mxu0 0
  %915 = vmatpush1.bf16.msra.mxu0 %v875
  %916 = vmatprep.subr.bf16.mxu0 0
  %917 = vmatpush1.bf16.msra.mxu0 %v876
  %918 = vmatprep.subr.bf16.mxu0 0
  %919 = vmatpush1.bf16.msra.mxu0 %v877
  %920 = vmatprep.subr.bf16.mxu0 0
  %921 = vmatpush1.bf16.msra.mxu0 %v878
  %922 = vmatprep.subr.bf16.mxu0 0
  %923 = vmatpush1.bf16.msra.mxu0 %v879
  %924 = vmatprep.subr.bf16.mxu0 0
  %925 = vmatpush1.bf16.msra.mxu0 %v880
  %926 = vmatprep.subr.bf16.mxu0 0
  %927 = vmatpush1.bf16.msra.mxu0 %v881
  %928 = vmatprep.subr.bf16.mxu0 0
  %929 = vmatpush1.bf16.msra.mxu0 %v882
  %930 = vmatprep.subr.bf16.mxu0 0
  %931 = vmatpush1.bf16.msra.mxu0 %v883
  %932 = vmatprep.mubr.bf16.mxu0 %v764
  %933 = vmatmul.mubr.bf16.gmra.mrb[0].mxu0 %v763
  %v934 = vpop.f32.mrb[0].mxu0
  %v935 = vadd.f32 %v802, %v934
  %v936 = vpop.f32.mrb[0].mxu0
  %v937 = vpop.f32.mrb[0].mxu0
  %v938 = vpop.f32.mrb[0].mxu0
  %939 = vdwg.mxu0
  %v940 = vmax.f32 %v935, 0.0
  %v941 = vpack.c.bf16 %v940, %v940
  %v942 = vld [vmem:[%s7] sm:$0xf]
  %v943 = vld [vmem:[%s7 + $0x4] sm:$0xf]
  %v944 = vld [vmem:[%s7 + $0x8] sm:$0xf]
  %v945 = vld [vmem:[%s7 + $0xc] sm:$0xf]
  %v946 = vld [vmem:[%s7 + $0x10] sm:$0xf]
  %v947 = vld [vmem:[%s7 + $0x14] sm:$0xf]
  %v948 = vld [vmem:[%s7 + $0x18] sm:$0xf]
  %v949 = vld [vmem:[%s7 + $0x1c] sm:$0xf]
  %v950 = vld [vmem:[%s7 + $0x20] sm:$0xf]
  %v951 = vld [vmem:[%s7 + $0x24] sm:$0xf]
  %v952 = vld [vmem:[%s7 + $0x28] sm:$0xf]
  %v953 = vld [vmem:[%s7 + $0x2c] sm:$0xf]
  %v954 = vld [vmem:[%s7 + $0x30] sm:$0xf]
  %v955 = vld [vmem:[%s7 + $0x34] sm:$0xf]
  %v956 = vld [vmem:[%s7 + $0x38] sm:$0xf]
  %v957 = vld [vmem:[%s7 + $0x3c] sm:$0xf]
  %v958 = vld [vmem:[%s8] sm:$0x1]
  %v960 = vlaneseq
  %v961 = vshrl.u32 %v960, 7
  %v962 = vsub.s32 0, %v961
  %v963 = vrot.slane %v958, %v962
  %v981 = vunpack.c.l.b16 %v942
  %v982 = vunpack.c.l.b16 %v943
  %v983 = vunpack.c.l.b16 %v944
  %v984 = vunpack.c.l.b16 %v945
  %v985 = vunpack.c.l.b16 %v946
  %v986 = vunpack.c.l.b16 %v947
  %v987 = vunpack.c.l.b16 %v948
  %v988 = vunpack.c.l.b16 %v949
  %v989 = vunpack.c.l.b16 %v950
  %v990 = vunpack.c.l.b16 %v951
  %v991 = vunpack.c.l.b16 %v952
  %v992 = vunpack.c.l.b16 %v953
  %v993 = vunpack.c.l.b16 %v954
  %v994 = vunpack.c.l.b16 %v955
  %v995 = vunpack.c.l.b16 %v956
  %v996 = vunpack.c.l.b16 %v957
  %v997 = vpack.c.b16 %v982, %v981
  %v998 = vpack.c.b16 %v984, %v983
  %v999 = vpack.c.b16 %v986, %v985
  %v1000 = vpack.c.b16 %v988, %v987
  %v1001 = vpack.c.b16 %v990, %v989
  %v1002 = vpack.c.b16 %v992, %v991
  %v1003 = vpack.c.b16 %v994, %v993
  %v1004 = vpack.c.b16 %v996, %v995
  %1013 = vmatprep.subr.bf16.mxu0 0
  %1014 = vmatpush1.bf16.msra.mxu0 %v997
  %1015 = vmatprep.subr.bf16.mxu0 0
  %1016 = vmatpush1.bf16.msra.mxu0 %v998
  %1017 = vmatprep.subr.bf16.mxu0 0
  %1018 = vmatpush1.bf16.msra.mxu0 %v999
  %1019 = vmatprep.subr.bf16.mxu0 0
  %1020 = vmatpush1.bf16.msra.mxu0 %v1000
  %1021 = vmatprep.subr.bf16.mxu0 0
  %1022 = vmatpush1.bf16.msra.mxu0 %v1001
  %1023 = vmatprep.subr.bf16.mxu0 0
  %1024 = vmatpush1.bf16.msra.mxu0 %v1002
  %1025 = vmatprep.subr.bf16.mxu0 0
  %1026 = vmatpush1.bf16.msra.mxu0 %v1003
  %1027 = vmatprep.subr.bf16.mxu0 0
  %1028 = vmatpush1.bf16.msra.mxu0 %v1004
  %1029 = vmatprep.subr.bf16.mxu0 0
  %1030 = vmatpush1.bf16.msra.mxu0 0
  %1031 = vmatprep.subr.bf16.mxu0 0
  %1032 = vmatpush1.bf16.msra.mxu0 0
  %1033 = vmatprep.subr.bf16.mxu0 0
  %1034 = vmatpush1.bf16.msra.mxu0 0
  %1035 = vmatprep.subr.bf16.mxu0 0
  %1036 = vmatpush1.bf16.msra.mxu0 0
  %1037 = vmatprep.subr.bf16.mxu0 0
  %1038 = vmatpush1.bf16.msra.mxu0 0
  %1039 = vmatprep.subr.bf16.mxu0 0
  %1040 = vmatpush1.bf16.msra.mxu0 0
  %1041 = vmatprep.subr.bf16.mxu0 0
  %1042 = vmatpush1.bf16.msra.mxu0 0
  %1043 = vmatprep.subr.bf16.mxu0 0
  %1044 = vmatpush1.bf16.msra.mxu0 0
  %1045 = vmatprep.mubr.bf16.mxu0 0
  %1046 = vmatmul.mubr.bf16.gmra.mrb[0].mxu0 %v941
  %v1047 = vpop.f32.mrb[0].mxu0
  %v1048 = vadd.f32 %v963, %v1047
  %v1049 = vpop.f32.mrb[0].mxu0
  %v1050 = vpop.f32.mrb[0].mxu0
  %v1051 = vpop.f32.mrb[0].mxu0
  %1052 = vdwg.mxu0
  %v1053 = vpack.c.bf16 %v1048, %v1048
  %1054 = vst [vmem:[%s9] sm:$0xf] %v1053
  // Predicated region
  $region38: #{mnist_mlp_forward.1} parent=0 // pred_check
    _
  $region39: #{mnist_mlp_forward.1} parent=0 // pred_check_branch
    %1056 = sbr.rel (0) target = $region41
  $region40: #{mnist_mlp_forward.1} parent=0 // pred_region
    _
  $region41: #{mnist_mlp_forward.1} parent=0 // pred_fallthru
    _
  // Predicated region
  $region42: #{mnist_mlp_forward.1} parent=0 // pred_check
    _
  $region43: #{mnist_mlp_forward.1} parent=0 // pred_check_branch
    %1058 = sbr.rel (0) target = $region45
  $region44: #{mnist_mlp_forward.1} parent=0 // pred_region
    _
  $region45: #{mnist_mlp_forward.1} parent=0 // pred_fallthru
    _

</llo_original>
